<compile_context>
chip_gen: v6e
topology: v6e:2x2x1
jax: 0.10.0
libtpu: 0.0.40
codegen_flags: <defaults>
</compile_context>

<pallas_src>
import functools

import numpy as np
import jax
import jax.numpy as jnp
from jax import lax
from jax.experimental import pallas as pl
from jax.experimental.pallas import tpu as pltpu

# ----------------------------- small synthetic config -----------------------
NUM_CHANNELS = 3
IMAGE_SIZE = 32
PATCH_SIZE = 4
HIDDEN_SIZE = 256                              # POSITION_EMBEDDING_LENGTH
PATCH_NUM_HEIGHT = IMAGE_SIZE // PATCH_SIZE    # 8
PATCH_NUM_WIDTH = IMAGE_SIZE // PATCH_SIZE     # 8
MAX_PATCHES = PATCH_NUM_HEIGHT * PATCH_NUM_WIDTH      # 64
NUM_POSITIONS = MAX_PATCHES + 1                        # 65
K_IM2COL = NUM_CHANNELS * PATCH_SIZE * PATCH_SIZE      # 48
K_GRID = PATCH_NUM_WIDTH * PATCH_NUM_HEIGHT            # 64
K_FUSED = 1 + K_IM2COL + K_GRID                        # 113
K_PAD = 128                                            # lane/MXU-aligned K


# --------------------- bicubic resample weights (PyTorch exact) -------------
def _cubic1(x, A):
    return ((A + 2.0) * x - (A + 3.0)) * x * x + 1.0


def _cubic2(x, A):
    return ((A * x - 5.0 * A) * x + 8.0 * A) * x - 4.0 * A


def _bicubic_matrix(in_size, out_size, A=-0.75):
    """[out_size, in_size] matrix replicating F.interpolate(mode='bicubic',
    align_corners=False) along one axis (edge-clamped taps)."""
    M = np.zeros((out_size, in_size), dtype=np.float64)
    scale = in_size / out_size
    for i in range(out_size):
        src = (i + 0.5) * scale - 0.5
        fl = int(np.floor(src))
        t = src - fl
        w = [_cubic2(t + 1.0, A), _cubic1(t, A), _cubic1(1.0 - t, A), _cubic2(2.0 - t, A)]
        for k in range(4):
            idx = min(max(fl - 1 + k, 0), in_size - 1)
            M[i, idx] += w[k]
    return M


@functools.lru_cache(maxsize=128)
def _build_pmat(h_n, w_n):
    """[MAX_PATCHES, K_GRID] matrix P such that P @ pos_emb[1:] equals the
    interpolated-then-zero-padded position embedding of the torch module.
    NOTE: hw_patch_nums are host Python ints; a new (h, w) pair implies host
    numpy work + a new baked constant -> retrace (perf, not correctness, hazard)."""
    h_n, w_n = int(h_n), int(w_n)
    A = _bicubic_matrix(PATCH_NUM_WIDTH, h_n)    # torch interpolates dim of size W0 -> h_n
    B = _bicubic_matrix(PATCH_NUM_HEIGHT, w_n)   # and dim of size H0 -> w_n
    body = np.kron(A, B)                         # [h_n*w_n, W0*H0]
    P = np.zeros((MAX_PATCHES, K_GRID), dtype=np.float64)
    P[: h_n * w_n, :] = body                     # F.pad with zero rows
    return P.astype(np.float32)


# ------------------------------- Pallas kernel -------------------------------
def _embed_kernel(xp_ref, wp_ref, out_ref):
    # xp_ref:  [M, K_PAD]  fused rows over all images:
    #          [onehot_cls(1) | im2col(48) | bicubic-row(64) | zero-pad(15)]
    # wp_ref:  [K_PAD, D]  fused weight: [cls+pe0 ; conv weight ; pe[1:] ; zeros]
    # out_ref: [M, D]
    #
    # Single MXU contraction covering every image.  CLS rows are selected by
    # the one-hot column; patch_embed + pos_embed accumulate inside the MXU.
    # One lane-dense [M, 256] store, no concatenate / sublane shifts.
    out_ref[...] = jnp.dot(
        xp_ref[...], wp_ref[...], preferred_element_type=jnp.float32
    ).astype(out_ref.dtype)


def adapt_clip_vision_embeddings(pixel_values, hw_patch_nums, params):
    """pixel_values: [B, C, H, W] float32 (NCHW).  hw_patch_nums: list of
    (h_n, w_n) Python ints, one per batch element.  Returns [B, 1+MAX_PATCHES, D]."""
    B, C, H, W = pixel_values.shape
    P = PATCH_SIZE
    HP, WP = H // P, W // P
    N = HP * WP
    D = HIDDEN_SIZE
    assert N == MAX_PATCHES
    M = B * (N + 1)                                      # 130 rows total

    # --- glue: im2col (NCHW -> [B, N, C*P*P], patch vector in (c, ph, pw) order)
    x = pixel_values.reshape(B, C, HP, P, WP, P)
    x = jnp.transpose(x, (0, 2, 4, 1, 3, 5)).reshape(B, N, K_IM2COL)

    # --- host-built constant base: one-hot CLS column + per-image bicubic
    #     matrices + K zero-padding, all pre-baked so the traced wrapper does a
    #     single dynamic_update_slice (one HBM materialisation) instead of
    #     concat + pad + scatter.
    base_np = np.zeros((B, N + 1, K_PAD), dtype=np.float32)
    base_np[:, 0, 0] = 1.0                               # one-hot selects CLS row of wp
    for b, (h_n, w_n) in enumerate(hw_patch_nums):
        base_np[b, 1:, 1 + K_IM2COL:K_FUSED] = _build_pmat(h_n, w_n)
    base = jnp.asarray(base_np)

    # Drop the im2col patches into columns [1, 1+K_IM2COL); batch fold to M is a
    # free reshape.
    xp = lax.dynamic_update_slice(base, x, (0, 1, 1)).reshape(M, K_PAD)

    # --- fused weight: [cls+pe0 ; conv weight ; pe[1:] ; zeros]  ->  [K_PAD, D]
    w_mat = params["patch_weight"].reshape(D, K_IM2COL).T          # [48, D]
    pe = params["position_embedding"]                              # [NUM_POSITIONS, D]
    cls = params["class_embedding"].reshape(1, D)                  # [1, D]
    wp = jnp.concatenate(
        [cls + pe[0:1], w_mat, pe[1:], jnp.zeros((K_PAD - K_FUSED, D), jnp.float32)],
        axis=0)

    # Single grid step: the whole batch is one [130,128]@[128,256] MXU matmul.
    # VMEM footprint (f32, double-buffered) is < 1 MiB, well under every
    # generation's scoped limit.
    # TODO(synk): at real CLIP sizes (N=576, D=1024) tile M per grid step,
    # set vmem_limit_bytes, use bf16 inputs, and revisit CORE_PARALLEL on v7x.
    out = pl.pallas_call(
        _embed_kernel,
        out_shape=jax.ShapeDtypeStruct((M, D), jnp.float32),
        grid=(1,),
        in_specs=[
            pl.BlockSpec((M, K_PAD), lambda i: (0, 0)),
            pl.BlockSpec((K_PAD, D), lambda i: (0, 0)),
        ],
        out_specs=pl.BlockSpec((M, D), lambda i: (0, 0)),
        compiler_params=pltpu.CompilerParams(dimension_semantics=("arbitrary",)),
    )(xp, wp)
    return out.reshape(B, N + 1, D)


# ------------------------------ plain-JAX reference --------------------------
def _reference(pixel_values, hw_patch_nums, params):
    B = pixel_values.shape[0]
    D = HIDDEN_SIZE
    patch = lax.conv_general_dilated(
        pixel_values, params["patch_weight"],
        window_strides=(PATCH_SIZE, PATCH_SIZE), padding="VALID",
        dimension_numbers=("NCHW", "OIHW", "NCHW"))          # [B, D, HP, WP]
    patch = patch.reshape(B, D, -1).transpose(0, 2, 1)        # [B, N, D]
    cls = jnp.broadcast_to(params["class_embedding"].reshape(1, 1, D), (B, 1, D))
    emb = jnp.concatenate([cls, patch], axis=1)
    pe = params["position_embedding"]
    pos = []
    for (h, w) in hw_patch_nums:
        body = jnp.asarray(_build_pmat(h, w)) @ pe[1:]
        pos.append(jnp.concatenate([pe[0:1], body], axis=0))
    return emb + jnp.stack(pos)


# ----------------------------------- main ------------------------------------
if __name__ == "__main__":
    key = jax.random.PRNGKey(0)
    k_px, k_w, k_cls, k_pos = jax.random.split(key, 4)

    B = 2
    pixel_values = jax.random.normal(k_px, (B, NUM_CHANNELS, IMAGE_SIZE, IMAGE_SIZE),
                                     dtype=jnp.float32)
    params = {
        # nn.Conv2d(C, D, kernel=P, stride=P, bias=False) weight: [D, C, P, P]
        "patch_weight": jax.random.normal(
            k_w, (HIDDEN_SIZE, NUM_CHANNELS, PATCH_SIZE, PATCH_SIZE), dtype=jnp.float32) * 0.02,
        # nn.Parameter(torch.randn(D))
        "class_embedding": jax.random.normal(k_cls, (HIDDEN_SIZE,), dtype=jnp.float32),
        # nn.Embedding(num_positions, D).weight
        "position_embedding": jax.random.normal(
            k_pos, (NUM_POSITIONS, HIDDEN_SIZE), dtype=jnp.float32) * 0.02,
    }
    hw_patch_nums = [(PATCH_NUM_HEIGHT, PATCH_NUM_WIDTH), (6, 5)]

    out = adapt_clip_vision_embeddings(pixel_values, hw_patch_nums, params)
    out = jax.block_until_ready(out)

    ref = jax.block_until_ready(_reference(pixel_values, hw_patch_nums, params))
    assert out.shape == (B, MAX_PATCHES + 1, HIDDEN_SIZE)
    np.testing.assert_allclose(np.asarray(out), np.asarray(ref), rtol=1e-4, atol=1e-4)

    print("KERNEL_OK")
</pallas_src>

<mosaic_0001>
module attributes {stable_mosaic.version = 11 : i64} {
  func.func @_embed_kernel(%arg0: i32, %arg1: memref<130x128xf32, #tpu.memory_space<vmem>>, %arg2: memref<128x256xf32, #tpu.memory_space<vmem>>, %arg3: memref<130x256xf32, #tpu.memory_space<vmem>>) attributes {dimension_semantics = [#tpu.dimension_semantics<arbitrary>], iteration_bounds = array<i64: 1>, scalar_prefetch = 0 : i64, scratch_operands = 0 : i64, tpu.core_type = #tpu.core_type<tc>, window_params = [{pipeline_mode = #tpu.pipeline_mode<synchronous>, transform_indices = @transform_0, window_bounds = array<i64: 130, 128>}, {pipeline_mode = #tpu.pipeline_mode<synchronous>, transform_indices = @transform_1, window_bounds = array<i64: 128, 256>}, {pipeline_mode = #tpu.pipeline_mode<synchronous>, transform_indices = @transform_2, window_bounds = array<i64: 130, 256>}]} {
    %c0 = arith.constant 0 : index
    %c0_0 = arith.constant 0 : index
    %0 = vector.load %arg1[%c0, %c0_0] : memref<130x128xf32, #tpu.memory_space<vmem>>, vector<130x128xf32>
    %c0_1 = arith.constant 0 : index
    %c0_2 = arith.constant 0 : index
    %1 = vector.load %arg2[%c0_1, %c0_2] : memref<128x256xf32, #tpu.memory_space<vmem>>, vector<128x256xf32>
    %cst = arith.constant dense<0.000000e+00> : vector<130x256xf32>
    %2 = tpu.matmul %0, %1, %cst {dimension_numbers = #tpu.dot_dimension_numbers<[1], [0], [0], [1], [0, 0, 1, 1], [], []>} : vector<130x128xf32>, vector<128x256xf32>, vector<130x256xf32> -> vector<130x256xf32>
    %c0_3 = arith.constant 0 : index
    %c0_4 = arith.constant 0 : index
    %3 = vector.load %arg3[%c0_3, %c0_4] : memref<130x256xf32, #tpu.memory_space<vmem>>, vector<130x256xf32>
    tpu.vector_store %arg3[%c0_3, %c0_4], %2 {strides = array<i32>} : memref<130x256xf32, #tpu.memory_space<vmem>>, vector<130x256xf32>,
    return
  }
  func.func @transform_0(%arg0: i32) -> (i32, i32) {
    %c0_i32 = arith.constant 0 : i32
    %c0_i32_0 = arith.constant 0 : i32
    %c0_i32_1 = arith.constant 0 : i32
    return %c0_i32, %c0_i32_0 : i32, i32
  }
  func.func @transform_1(%arg0: i32) -> (i32, i32) {
    %c0_i32 = arith.constant 0 : i32
    %c0_i32_0 = arith.constant 0 : i32
    %c0_i32_1 = arith.constant 0 : i32
    return %c0_i32, %c0_i32_0 : i32, i32
  }
  func.func @transform_2(%arg0: i32) -> (i32, i32) {
    %c0_i32 = arith.constant 0 : i32
    %c0_i32_0 = arith.constant 0 : i32
    %c0_i32_1 = arith.constant 0 : i32
    return %c0_i32, %c0_i32_0 : i32, i32
  }
}

</mosaic_0001>

<llo_original>
// kernel: tpu_custom_call.1
$region0: #{tpu_custom_call.1}
  #allocation0 [shape = 'u32[]', space=smem, size = 0x4, offset = 0x4, fixed_abs, tag = 'smem constant byte address 0x4 - core index']
  #allocation1 [shape = 'u32[144,128]{1,0:T(1,128)}', space=vmem, size = 0x12000, scoped, tag = 'internal scratch']
  %s0 = inlined_call_operand.hbm [shape: f32[130,128], index: 0, kind: input, shape index: {}]
  %s1 = inlined_call_operand.hbm [shape: f32[128,256], index: 1, kind: input, shape index: {}]
  %s2 = inlined_call_operand.hbm [shape: f32[130,256], index: 2, kind: output, shape index: {}]
  %s3 = sld [smem:[#allocation0]]
  $region26: #{tpu_custom_call.1} parent=0
    _
  %s5 = ssub.s32 1, %s3
  %s6 = scalar_select 0, %s5, %s3
  $region1: #{tpu_custom_call.1} parent=0
    #allocation2 [shape = 'u8[69632]{0}', space=vmem, size = 0x11000, scoped, tag = 'input window, operand 0, single buffered']
    #allocation3 [shape = 's32[1]{0}', space=sflag, size = 0x4, scoped, tag = 'scoped memory for tpu_custom_call.1']
    #allocation4 [shape = 's32[1]{0}', space=sflag, size = 0x4, scoped, tag = 'scoped memory for tpu_custom_call.1']
    #allocation5 [shape = 'u8[131072]{0}', space=vmem, size = 0x20000, scoped, tag = 'input window, operand 1, single buffered']
    #allocation6 [shape = 's32[1]{0}', space=sflag, size = 0x4, scoped, tag = 'scoped memory for tpu_custom_call.1']
    #allocation7 [shape = 'u8[139264]{0}', space=vmem, size = 0x22000, scoped, tag = 'output window, operand 0, single buffered']
    %7 = vsyncpa [#allocation3], 0
    %8 = vsyncpa [#allocation6], 0
    %9 = vsyncpa [#allocation4], 0
    // Predicated region
    $region2: #{tpu_custom_call.1} parent=1 // pred_check
      _
    $region3: #{tpu_custom_call.1} parent=1 // pred_check_branch
      %11 = sbr.rel (0) target = $region5
    $region4: #{tpu_custom_call.1} parent=1 // pred_region
      %s13 = ssub.s32 2176, 2176
      %14 = vsyncadd [#allocation3], %s13
      %s15 = sshll.u32 [#allocation2], 4
      %s16 = int_to_ptr.vmem [resolvable:$true] %s15
      %21 = dma.hbm_to_vmem [thread:$0]  %s0, 2176, %s16, [#allocation3], 128, 128, 8
    $region5: #{tpu_custom_call.1} parent=1 // pred_fallthru
      _
    // Predicated region
    $region6: #{tpu_custom_call.1} parent=1 // pred_check
      _
    $region7: #{tpu_custom_call.1} parent=1 // pred_check_branch
      %23 = sbr.rel (0) target = $region9
    $region8: #{tpu_custom_call.1} parent=1 // pred_region
      %s25 = ssub.s32 4096, 4096
      %26 = vsyncadd [#allocation6], %s25
      %s27 = sshll.u32 [#allocation5], 4
      %s28 = int_to_ptr.vmem [resolvable:$true] %s27
      %33 = dma.hbm_to_vmem [thread:$0]  %s1, 4096, %s28, [#allocation6], 256, 256, 16
    $region9: #{tpu_custom_call.1} parent=1 // pred_fallthru
      _
    // Predicated region
    $region10: #{tpu_custom_call.1} parent=1 // pred_check
      _
    $region11: #{tpu_custom_call.1} parent=1 // pred_check_branch
      %35 = sbr.rel (0) target = $region13
    $region12: #{tpu_custom_call.1} parent=1 // pred_region
      %36 = dma.done [#allocation3], 2176
    $region13: #{tpu_custom_call.1} parent=1 // pred_fallthru
      _
    // Predicated region
    $region14: #{tpu_custom_call.1} parent=1 // pred_check
      _
    $region15: #{tpu_custom_call.1} parent=1 // pred_check_branch
      %38 = sbr.rel (0) target = $region17
    $region16: #{tpu_custom_call.1} parent=1 // pred_region
      %39 = dma.done [#allocation6], 4096
    $region17: #{tpu_custom_call.1} parent=1 // pred_fallthru
      _
    %v40 = vld [vmem:[#allocation2] sm:$0xff]
    %v41 = vld [vmem:[#allocation2 + $0x8] sm:$0xff]
    %v42 = vld [vmem:[#allocation2 + $0x10] sm:$0xff]
    %v43 = vld [vmem:[#allocation2 + $0x18] sm:$0xff]
    %v44 = vld [vmem:[#allocation2 + $0x20] sm:$0xff]
    %v45 = vld [vmem:[#allocation2 + $0x28] sm:$0xff]
    %v46 = vld [vmem:[#allocation2 + $0x30] sm:$0xff]
    %v47 = vld [vmem:[#allocation2 + $0x38] sm:$0xff]
    %v48 = vld [vmem:[#allocation2 + $0x40] sm:$0xff]
    %v49 = vld [vmem:[#allocation2 + $0x48] sm:$0xff]
    %v50 = vld [vmem:[#allocation2 + $0x50] sm:$0xff]
    %v51 = vld [vmem:[#allocation2 + $0x58] sm:$0xff]
    %v52 = vld [vmem:[#allocation2 + $0x60] sm:$0xff]
    %v53 = vld [vmem:[#allocation2 + $0x68] sm:$0xff]
    %v54 = vld [vmem:[#allocation2 + $0x70] sm:$0xff]
    %v55 = vld [vmem:[#allocation2 + $0x78] sm:$0xff]
    %v56 = vld [vmem:[#allocation2 + $0x80] sm:$0x3]
    %v57 = vld [vmem:[#allocation5] sm:$0xff]
    %v58 = vld [vmem:[#allocation5 + $0x8] sm:$0xff]
    %v59 = vld [vmem:[#allocation5 + $0x10] sm:$0xff]
    %v60 = vld [vmem:[#allocation5 + $0x18] sm:$0xff]
    %v61 = vld [vmem:[#allocation5 + $0x20] sm:$0xff]
    %v62 = vld [vmem:[#allocation5 + $0x28] sm:$0xff]
    %v63 = vld [vmem:[#allocation5 + $0x30] sm:$0xff]
    %v64 = vld [vmem:[#allocation5 + $0x38] sm:$0xff]
    %v65 = vld [vmem:[#allocation5 + $0x40] sm:$0xff]
    %v66 = vld [vmem:[#allocation5 + $0x48] sm:$0xff]
    %v67 = vld [vmem:[#allocation5 + $0x50] sm:$0xff]
    %v68 = vld [vmem:[#allocation5 + $0x58] sm:$0xff]
    %v69 = vld [vmem:[#allocation5 + $0x60] sm:$0xff]
    %v70 = vld [vmem:[#allocation5 + $0x68] sm:$0xff]
    %v71 = vld [vmem:[#allocation5 + $0x70] sm:$0xff]
    %v72 = vld [vmem:[#allocation5 + $0x78] sm:$0xff]
    %v73 = vld [vmem:[#allocation5 + $0x80] sm:$0xff]
    %v74 = vld [vmem:[#allocation5 + $0x88] sm:$0xff]
    %v75 = vld [vmem:[#allocation5 + $0x90] sm:$0xff]
    %v76 = vld [vmem:[#allocation5 + $0x98] sm:$0xff]
    %v77 = vld [vmem:[#allocation5 + $0xa0] sm:$0xff]
    %v78 = vld [vmem:[#allocation5 + $0xa8] sm:$0xff]
    %v79 = vld [vmem:[#allocation5 + $0xb0] sm:$0xff]
    %v80 = vld [vmem:[#allocation5 + $0xb8] sm:$0xff]
    %v81 = vld [vmem:[#allocation5 + $0xc0] sm:$0xff]
    %v82 = vld [vmem:[#allocation5 + $0xc8] sm:$0xff]
    %v83 = vld [vmem:[#allocation5 + $0xd0] sm:$0xff]
    %v84 = vld [vmem:[#allocation5 + $0xd8] sm:$0xff]
    %v85 = vld [vmem:[#allocation5 + $0xe0] sm:$0xff]
    %v86 = vld [vmem:[#allocation5 + $0xe8] sm:$0xff]
    %v87 = vld [vmem:[#allocation5 + $0xf0] sm:$0xff]
    %v88 = vld [vmem:[#allocation5 + $0xf8] sm:$0xff]
    %89 = vmatprep.subr.mxu0 %v88
    %90 = vmatpush1.msra.mxu0 %v87
    %91 = vmatprep.subr.mxu0 %v86
    %92 = vmatpush1.msra.mxu0 %v85
    %93 = vmatprep.subr.mxu0 %v84
    %94 = vmatpush1.msra.mxu0 %v83
    %95 = vmatprep.subr.mxu0 %v82
    %96 = vmatpush1.msra.mxu0 %v81
    %97 = vmatprep.subr.mxu0 %v80
    %98 = vmatpush1.msra.mxu0 %v79
    %99 = vmatprep.subr.mxu0 %v78
    %100 = vmatpush1.msra.mxu0 %v77
    %101 = vmatprep.subr.mxu0 %v76
    %102 = vmatpush1.msra.mxu0 %v75
    %103 = vmatprep.subr.mxu0 %v74
    %104 = vmatpush1.msra.mxu0 %v73
    %105 = vmatprep.subr.mxu0 %v72
    %106 = vmatpush1.msra.mxu0 %v71
    %107 = vmatprep.subr.mxu0 %v70
    %108 = vmatpush1.msra.mxu0 %v69
    %109 = vmatprep.subr.mxu0 %v68
    %110 = vmatpush1.msra.mxu0 %v67
    %111 = vmatprep.subr.mxu0 %v66
    %112 = vmatpush1.msra.mxu0 %v65
    %113 = vmatprep.subr.mxu0 %v64
    %114 = vmatpush1.msra.mxu0 %v63
    %115 = vmatprep.subr.mxu0 %v62
    %116 = vmatpush1.msra.mxu0 %v61
    %117 = vmatprep.subr.mxu0 %v60
    %118 = vmatpush1.msra.mxu0 %v59
    %119 = vmatprep.subr.mxu0 %v58
    %120 = vmatpush1.msra.mxu0 %v57
    %121 = vmatprep.subr.mxu0 0.0
    %122 = vmatpush2.msra.mxu0 0.0
    %123 = vmatprep.subr.mxu0 0.0
    %124 = vmatpush2.msra.mxu0 0.0
    %125 = vmatprep.subr.mxu0 0.0
    %126 = vmatpush2.msra.mxu0 0.0
    %127 = vmatprep.subr.mxu0 0.0
    %128 = vmatpush2.msra.mxu0 0.0
    %129 = vmatprep.subr.mxu0 0.0
    %130 = vmatpush2.msra.mxu0 0.0
    %131 = vmatprep.subr.mxu0 0.0
    %132 = vmatpush2.msra.mxu0 0.0
    %133 = vmatprep.subr.mxu0 0.0
    %134 = vmatpush2.msra.mxu0 0.0
    %135 = vmatprep.subr.mxu0 0.0
    %136 = vmatpush2.msra.mxu0 0.0
    %137 = vmatprep.subr.mxu0 0.0
    %138 = vmatpush2.msra.mxu0 0.0
    %139 = vmatprep.subr.mxu0 0.0
    %140 = vmatpush2.msra.mxu0 0.0
    %141 = vmatprep.subr.mxu0 0.0
    %142 = vmatpush2.msra.mxu0 0.0
    %143 = vmatprep.subr.mxu0 0.0
    %144 = vmatpush2.msra.mxu0 0.0
    %145 = vmatprep.subr.mxu0 0.0
    %146 = vmatpush2.msra.mxu0 0.0
    %147 = vmatprep.subr.mxu0 0.0
    %148 = vmatpush2.msra.mxu0 0.0
    %149 = vmatprep.subr.mxu0 0.0
    %150 = vmatpush2.msra.mxu0 0.0
    %151 = vmatprep.subr.mxu0 0.0
    %152 = vmatpush2.msra.mxu0 0.0
    %153 = vmatprep.mubr.f32.mxu0 0.0
    %154 = vmatmul.mubr.f32.gmra.mxu0 %v40
    %v155 = vpop.f32.mrf.mxu0
    %v156 = vadd.f32 0.0, %v155
    %v157 = vpop.f32.mrf.mxu0
    %v158 = vadd.f32 0.0, %v157
    %159 = vmatprep.mubr.f32.mxu0 0.0
    %160 = vmatmul.mubr.f32.gmra.mxu0 %v41
    %v161 = vpop.f32.mrf.mxu0
    %v162 = vadd.f32 0.0, %v161
    %v163 = vpop.f32.mrf.mxu0
    %v164 = vadd.f32 0.0, %v163
    %165 = vmatprep.mubr.f32.mxu0 0.0
    %166 = vmatmul.mubr.f32.gmra.mxu0 %v42
    %v167 = vpop.f32.mrf.mxu0
    %v168 = vadd.f32 0.0, %v167
    %v169 = vpop.f32.mrf.mxu0
    %v170 = vadd.f32 0.0, %v169
    %171 = vmatprep.mubr.f32.mxu0 0.0
    %172 = vmatmul.mubr.f32.gmra.mxu0 %v43
    %v173 = vpop.f32.mrf.mxu0
    %v174 = vadd.f32 0.0, %v173
    %v175 = vpop.f32.mrf.mxu0
    %v176 = vadd.f32 0.0, %v175
    %177 = vmatprep.mubr.f32.mxu0 0.0
    %178 = vmatmul.mubr.f32.gmra.mxu0 %v44
    %v179 = vpop.f32.mrf.mxu0
    %v180 = vadd.f32 0.0, %v179
    %v181 = vpop.f32.mrf.mxu0
    %v182 = vadd.f32 0.0, %v181
    %183 = vmatprep.mubr.f32.mxu0 0.0
    %184 = vmatmul.mubr.f32.gmra.mxu0 %v45
    %v185 = vpop.f32.mrf.mxu0
    %v186 = vadd.f32 0.0, %v185
    %v187 = vpop.f32.mrf.mxu0
    %v188 = vadd.f32 0.0, %v187
    %189 = vmatprep.mubr.f32.mxu0 0.0
    %190 = vmatmul.mubr.f32.gmra.mxu0 %v46
    %v191 = vpop.f32.mrf.mxu0
    %v192 = vadd.f32 0.0, %v191
    %v193 = vpop.f32.mrf.mxu0
    %v194 = vadd.f32 0.0, %v193
    %195 = vmatprep.mubr.f32.mxu0 0.0
    %196 = vmatmul.mubr.f32.gmra.mxu0 %v47
    %v197 = vpop.f32.mrf.mxu0
    %v198 = vadd.f32 0.0, %v197
    %v199 = vpop.f32.mrf.mxu0
    %v200 = vadd.f32 0.0, %v199
    %201 = vmatprep.mubr.f32.mxu0 0.0
    %202 = vmatmul.mubr.f32.gmra.mxu0 %v48
    %v203 = vpop.f32.mrf.mxu0
    %v204 = vadd.f32 0.0, %v203
    %v205 = vpop.f32.mrf.mxu0
    %v206 = vadd.f32 0.0, %v205
    %207 = vmatprep.mubr.f32.mxu0 0.0
    %208 = vmatmul.mubr.f32.gmra.mxu0 %v49
    %v209 = vpop.f32.mrf.mxu0
    %v210 = vadd.f32 0.0, %v209
    %v211 = vpop.f32.mrf.mxu0
    %v212 = vadd.f32 0.0, %v211
    %213 = vmatprep.mubr.f32.mxu0 0.0
    %214 = vmatmul.mubr.f32.gmra.mxu0 %v50
    %v215 = vpop.f32.mrf.mxu0
    %v216 = vadd.f32 0.0, %v215
    %v217 = vpop.f32.mrf.mxu0
    %v218 = vadd.f32 0.0, %v217
    %219 = vmatprep.mubr.f32.mxu0 0.0
    %220 = vmatmul.mubr.f32.gmra.mxu0 %v51
    %v221 = vpop.f32.mrf.mxu0
    %v222 = vadd.f32 0.0, %v221
    %v223 = vpop.f32.mrf.mxu0
    %v224 = vadd.f32 0.0, %v223
    %225 = vmatprep.mubr.f32.mxu0 0.0
    %226 = vmatmul.mubr.f32.gmra.mxu0 %v52
    %v227 = vpop.f32.mrf.mxu0
    %v228 = vadd.f32 0.0, %v227
    %v229 = vpop.f32.mrf.mxu0
    %v230 = vadd.f32 0.0, %v229
    %231 = vmatprep.mubr.f32.mxu0 0.0
    %232 = vmatmul.mubr.f32.gmra.mxu0 %v53
    %v233 = vpop.f32.mrf.mxu0
    %v234 = vadd.f32 0.0, %v233
    %v235 = vpop.f32.mrf.mxu0
    %v236 = vadd.f32 0.0, %v235
    %237 = vmatprep.mubr.f32.mxu0 0.0
    %238 = vmatmul.mubr.f32.gmra.mxu0 %v54
    %v239 = vpop.f32.mrf.mxu0
    %v240 = vadd.f32 0.0, %v239
    %v241 = vpop.f32.mrf.mxu0
    %v242 = vadd.f32 0.0, %v241
    %243 = vmatprep.mubr.f32.mxu0 0.0
    %244 = vmatmul.mubr.f32.gmra.mxu0 %v55
    %v245 = vpop.f32.mrf.mxu0
    %v246 = vadd.f32 0.0, %v245
    %v247 = vpop.f32.mrf.mxu0
    %v248 = vadd.f32 0.0, %v247
    %249 = vmatprep.mubr.f32.mxu0 0.0
    %250 = vmatmul.mubr.f32.gmra.mxu0 %v56
    %v251 = vpop.f32.mrf.mxu0
    %v252 = vadd.f32 0.0, %v251
    %v253 = vpop.f32.mrf.mxu0
    %v254 = vadd.f32 0.0, %v253
    %255 = vdwg.mxu0
    %256 = vst [vmem:[#allocation7] sm:$0xff] %v156
    %257 = vst [vmem:[#allocation7 + $0x8] sm:$0xff] %v158
    %258 = vst [vmem:[#allocation7 + $0x10] sm:$0xff] %v162
    %259 = vst [vmem:[#allocation7 + $0x18] sm:$0xff] %v164
    %260 = vst [vmem:[#allocation7 + $0x20] sm:$0xff] %v168
    %261 = vst [vmem:[#allocation7 + $0x28] sm:$0xff] %v170
    %262 = vst [vmem:[#allocation7 + $0x30] sm:$0xff] %v174
    %263 = vst [vmem:[#allocation7 + $0x38] sm:$0xff] %v176
    %264 = vst [vmem:[#allocation7 + $0x40] sm:$0xff] %v180
    %265 = vst [vmem:[#allocation7 + $0x48] sm:$0xff] %v182
    %266 = vst [vmem:[#allocation7 + $0x50] sm:$0xff] %v186
    %267 = vst [vmem:[#allocation7 + $0x58] sm:$0xff] %v188
    %268 = vst [vmem:[#allocation7 + $0x60] sm:$0xff] %v192
    %269 = vst [vmem:[#allocation7 + $0x68] sm:$0xff] %v194
    %270 = vst [vmem:[#allocation7 + $0x70] sm:$0xff] %v198
    %271 = vst [vmem:[#allocation7 + $0x78] sm:$0xff] %v200
    %272 = vst [vmem:[#allocation7 + $0x80] sm:$0xff] %v204
    %273 = vst [vmem:[#allocation7 + $0x88] sm:$0xff] %v206
    %274 = vst [vmem:[#allocation7 + $0x90] sm:$0xff] %v210
    %275 = vst [vmem:[#allocation7 + $0x98] sm:$0xff] %v212
    %276 = vst [vmem:[#allocation7 + $0xa0] sm:$0xff] %v216
    %277 = vst [vmem:[#allocation7 + $0xa8] sm:$0xff] %v218
    %278 = vst [vmem:[#allocation7 + $0xb0] sm:$0xff] %v222
    %279 = vst [vmem:[#allocation7 + $0xb8] sm:$0xff] %v224
    %280 = vst [vmem:[#allocation7 + $0xc0] sm:$0xff] %v228
    %281 = vst [vmem:[#allocation7 + $0xc8] sm:$0xff] %v230
    %282 = vst [vmem:[#allocation7 + $0xd0] sm:$0xff] %v234
    %283 = vst [vmem:[#allocation7 + $0xd8] sm:$0xff] %v236
    %284 = vst [vmem:[#allocation7 + $0xe0] sm:$0xff] %v240
    %285 = vst [vmem:[#allocation7 + $0xe8] sm:$0xff] %v242
    %286 = vst [vmem:[#allocation7 + $0xf0] sm:$0xff] %v246
    %287 = vst [vmem:[#allocation7 + $0xf8] sm:$0xff] %v248
    %288 = vst [vmem:[#allocation7 + $0x100] sm:$0x3] %v252
    %289 = vst [vmem:[#allocation7 + $0x108] sm:$0x3] %v254
    // Predicated region
    $region18: #{tpu_custom_call.1} parent=1 // pred_check
      _
    $region19: #{tpu_custom_call.1} parent=1 // pred_check_branch
      %291 = sbr.rel (0) target = $region21
    $region20: #{tpu_custom_call.1} parent=1 // pred_region
      %s293 = ssub.s32 4352, 4352
      %294 = vsyncadd [#allocation4], %s293
      %s295 = sshll.u32 [#allocation7], 4
      %s296 = int_to_ptr.vmem [resolvable:$true] %s295
      %301 = dma.vmem_to_hbm [thread:$0]  %s296, 4352, %s2, [#allocation4], 256, 256, 16
    $region21: #{tpu_custom_call.1} parent=1 // pred_fallthru
      _
    // Predicated region
    $region22: #{tpu_custom_call.1} parent=1 // pred_check
      _
    $region23: #{tpu_custom_call.1} parent=1 // pred_check_branch
      %303 = sbr.rel (0) target = $region25
    $region24: #{tpu_custom_call.1} parent=1 // pred_region
      %304 = dma.done [#allocation4], 4352
    $region25: #{tpu_custom_call.1} parent=1 // pred_fallthru
      _
    %305 = vsyncpa [#allocation3], 1
    %306 = vsyncpa [#allocation6], 1
    %307 = vsyncpa [#allocation4], 1

</llo_original>
